<compile_context>
chip_gen: v7x
topology: tpu7x:2x2x1
jax: 0.10.0
libtpu: 0.0.40
codegen_flags: <defaults>
</compile_context>

<pallas_src>
import functools
import math
from typing import NamedTuple

import numpy as np
import jax
import jax.numpy as jnp
from jax.experimental import pallas as pl
from jax.experimental.pallas import tpu as pltpu


# ------------------------------ layout ---------------------------------------

def _rup(x, m):
    return ((x + m - 1) // m) * m


class Layout(NamedTuple):
    hidden: int
    ffn: int
    hpad: int          # hidden rounded up to 128 (per-projection lane block)
    max_length: int
    vpad: int          # padded token-vocab width (sublane aligned)
    vpl: int           # vpad + max_length, rounded to 8 (embedding rows)
    gg: int            # grid * grid
    gg_pad: int        # head width padded to 128 lanes
    width: int         # lane width of the packed parameter arrays
    r_emb: int
    r_wqkv: int
    r_wo: int
    r_w1: int
    r_w2: int
    r_wh: int
    rows: int          # total rows of the packed weight matrix array
    vrows: int         # rows of the packed 1-row-vector array


def make_layout(action_num, max_length, hidden, ffn, grid):
    vpad = _rup(action_num + 1, 8)
    vpl = _rup(vpad + max_length, 8)
    hpad = _rup(hidden, 128)
    gg = grid * grid
    gg_pad = _rup(gg, 128)
    width = max(3 * hpad, _rup(ffn, 128), gg_pad)
    r_emb = 0
    r_wqkv = _rup(r_emb + vpl, 8)
    r_wo = _rup(r_wqkv + hidden, 8)
    r_w1 = _rup(r_wo + hpad, 8)
    r_w2 = _rup(r_w1 + hidden, 8)
    r_wh = _rup(r_w2 + ffn, 8)
    rows = _rup(r_wh + hidden, 8)
    return Layout(hidden=hidden, ffn=ffn, hpad=hpad, max_length=max_length,
                  vpad=vpad, vpl=vpl, gg=gg, gg_pad=gg_pad, width=width,
                  r_emb=r_emb, r_wqkv=r_wqkv, r_wo=r_wo, r_w1=r_w1,
                  r_w2=r_w2, r_wh=r_wh, rows=rows, vrows=16)


# ----------------------------- Pallas kernel ---------------------------------

def _layernorm(h, gamma, beta, eps=1e-5):
    mu = jnp.mean(h, axis=-1, keepdims=True)
    var = jnp.mean((h - mu) ** 2, axis=-1, keepdims=True)
    return (h - mu) * jax.lax.rsqrt(var + eps) * gamma + beta


def actor_kernel(idx_ref, bias_ref, pool_ref, w_ref, v_ref, out_ref, *, lay):
    H, F = lay.hidden, lay.ffn
    HP, VPL, GGP = lay.hpad, lay.vpl, lay.gg_pad
    BL = idx_ref.shape[0]
    bf16, f32 = jnp.bfloat16, jnp.float32

    # --- packed parameters: static, 8/128-aligned row slices (free views) ----
    emb = w_ref[lay.r_emb:lay.r_emb + VPL, 0:H]            # (VPL, H)  tok+pos
    wqkv = w_ref[lay.r_wqkv:lay.r_wqkv + H, 0:3 * HP]      # (H, 3*HP)
    wo = w_ref[lay.r_wo:lay.r_wo + HP, 0:H]                # (HP, H)
    w1 = w_ref[lay.r_w1:lay.r_w1 + H, 0:F]                 # (H, F)
    w2 = w_ref[lay.r_w2:lay.r_w2 + F, 0:H]                 # (F, H)
    wh = w_ref[lay.r_wh:lay.r_wh + H, 0:GGP]               # (H, GGP)

    bqkv = v_ref[0:1, 0:3 * HP]
    bo = v_ref[1:2, 0:H]
    g1 = v_ref[2:3, 0:H]
    be1 = v_ref[3:4, 0:H]
    b1 = v_ref[4:5, 0:F]
    b2 = v_ref[5:6, 0:H]
    g2 = v_ref[6:7, 0:H]
    be2 = v_ref[7:8, 0:H]
    bh = v_ref[8:9, 0:GGP]                                  # pad lanes = -1e9

    # --- fused token + position embedding: one one-hot matmul on the MXU -----
    idx = idx_ref[...]                                      # (BL, 2) int32
    col = jax.lax.broadcasted_iota(jnp.int32, (BL, VPL), 1)
    hot = jnp.logical_or(col == idx[:, 0:1], col == idx[:, 1:2])
    onehot = jnp.where(hot, 1.0, 0.0).astype(bf16)          # (BL, VPL)
    x = jnp.dot(onehot, emb, preferred_element_type=f32)    # (BL, H) = tok+pos

    # --- fused QKV (1/sqrt(H) folded into Q block), tile-aligned slices ------
    qkv = jnp.dot(x.astype(bf16), wqkv, preferred_element_type=f32) + bqkv
    q = qkv[:, 0 * HP:1 * HP]      # (BL, HP); lanes >= H are exactly zero
    k = qkv[:, 1 * HP:2 * HP]
    v = qkv[:, 2 * HP:3 * HP]

    # --- flat masked self-attention: a single (BL, BL) score matmul ----------
    scores = jax.lax.dot_general(
        q.astype(bf16), k.astype(bf16),
        dimension_numbers=(((1,), (1,)), ((), ())),
        preferred_element_type=f32)                          # (BL, BL)
    scores = scores + bias_ref[...]                          # block-diag + pad mask
    scores = scores - jnp.max(scores, axis=-1, keepdims=True)
    p = jnp.exp(scores)
    # approx reciprocal is fine here (internal attention weights only)
    p = p * pl.reciprocal(jnp.sum(p, axis=-1, keepdims=True), approx=True)

    attn = jnp.dot(p.astype(bf16), v.astype(bf16),
                   preferred_element_type=f32)               # (BL, HP)
    proj = jnp.dot(attn.astype(bf16), wo, preferred_element_type=f32) + bo
    h1 = _layernorm(x + proj, g1, be1)                       # (BL, H) f32

    # --- feed-forward ---------------------------------------------------------
    ff = jnp.dot(h1.astype(bf16), w1, preferred_element_type=f32) + b1
    ff = jax.nn.gelu(ff, approximate=True)                   # EUP tanh-GELU
    ff = jnp.dot(ff.astype(bf16), w2, preferred_element_type=f32) + b2
    h2 = _layernorm(h1 + ff, g2, be2)

    # --- masked mean pooling as one block-diagonal matmul ---------------------
    pooled = jnp.dot(pool_ref[...].astype(bf16), h2.astype(bf16),
                     preferred_element_type=f32)             # (Bpad, H)

    # --- lane-dense classification head + EXACT output softmax ----------------
    logits = jnp.dot(pooled.astype(bf16), wh, preferred_element_type=f32) + bh
    z = logits - jnp.max(logits, axis=-1, keepdims=True)
    e = jnp.exp(z)                                           # pad lanes -> 0
    probs = e / jnp.sum(e, axis=-1, keepdims=True)           # exact normalization
    out_ref[...] = probs.astype(out_ref.dtype)


# ------------------------------ host wrapper ----------------------------------

def encode(sequences, max_length, action_num):
    """Faithful Python port of Actor.encode: pad/truncate + attention mask."""
    batch_actions, batch_masks = [], []
    for sequence in sequences:
        actions = list(sequence)
        if len(actions) < max_length:
            actions = actions + [action_num] * (max_length - len(actions))
        else:
            actions = actions[:max_length]
        mask = [1 if a != action_num else 0 for a in actions]
        batch_actions.append(actions)
        batch_masks.append(mask)
    return batch_actions, batch_masks


def init_params(key, action_num, max_length, hidden, ffn, grid):
    gg = grid * grid
    ks = jax.random.split(key, 9)
    std = 0.02
    return {
        'tok_emb': jax.random.normal(ks[0], (action_num + 1, hidden), jnp.float32) * std,
        'pos_emb': jax.random.normal(ks[1], (max_length, hidden), jnp.float32) * std,
        'wq': jax.random.normal(ks[2], (hidden, hidden), jnp.float32) * std,
        'wk': jax.random.normal(ks[3], (hidden, hidden), jnp.float32) * std,
        'wv': jax.random.normal(ks[4], (hidden, hidden), jnp.float32) * std,
        'wo': jax.random.normal(ks[5], (hidden, hidden), jnp.float32) * std,
        'w1': jax.random.normal(ks[6], (hidden, ffn), jnp.float32) * std,
        'w2': jax.random.normal(ks[7], (ffn, hidden), jnp.float32) * std,
        'wh': jax.random.normal(ks[8], (hidden, gg), jnp.float32) * std,
        'bq': jnp.zeros((1, hidden), jnp.float32),
        'bk': jnp.zeros((1, hidden), jnp.float32),
        'bv': jnp.zeros((1, hidden), jnp.float32),
        'bo': jnp.zeros((1, hidden), jnp.float32),
        'b1': jnp.zeros((1, ffn), jnp.float32),
        'b2': jnp.zeros((1, hidden), jnp.float32),
        'bh': jnp.zeros((1, gg), jnp.float32),
        'g1': jnp.ones((1, hidden), jnp.float32),
        'be1': jnp.zeros((1, hidden), jnp.float32),
        'g2': jnp.ones((1, hidden), jnp.float32),
        'be2': jnp.zeros((1, hidden), jnp.float32),
    }


def prepare_actor_params(params, lay):
    """One-time packing: all matrices in one bf16 ref, all vectors in one f32 ref."""
    H, F, HP, W = lay.hidden, lay.ffn, lay.hpad, lay.width
    L = lay.max_length
    scale = 1.0 / math.sqrt(float(H))

    def n(x):
        return np.asarray(x, np.float32)

    wpack = np.zeros((lay.rows, W), np.float32)
    V = params['tok_emb'].shape[0]
    # fused embedding table: rows [0, vpad) tokens, [vpad, vpad+L) positions
    wpack[lay.r_emb:lay.r_emb + V, :H] = n(params['tok_emb'])
    wpack[lay.r_emb + lay.vpad:lay.r_emb + lay.vpad + L, :H] = n(params['pos_emb'])
    # fused QKV, each projection in its own 128-lane block; scale folded into Q
    wpack[lay.r_wqkv:lay.r_wqkv + H, 0 * HP:0 * HP + H] = n(params['wq']) * scale
    wpack[lay.r_wqkv:lay.r_wqkv + H, 1 * HP:1 * HP + H] = n(params['wk'])
    wpack[lay.r_wqkv:lay.r_wqkv + H, 2 * HP:2 * HP + H] = n(params['wv'])
    wpack[lay.r_wo:lay.r_wo + H, :H] = n(params['wo'])        # rows >= H stay 0
    wpack[lay.r_w1:lay.r_w1 + H, :F] = n(params['w1'])
    wpack[lay.r_w2:lay.r_w2 + F, :H] = n(params['w2'])
    wpack[lay.r_wh:lay.r_wh + H, :lay.gg] = n(params['wh'])   # lanes >= gg stay 0

    vecs = np.zeros((lay.vrows, W), np.float32)
    vecs[0, 0 * HP:0 * HP + H] = n(params['bq'])[0] * scale
    vecs[0, 1 * HP:1 * HP + H] = n(params['bk'])[0]
    vecs[0, 2 * HP:2 * HP + H] = n(params['bv'])[0]
    vecs[1, :H] = n(params['bo'])[0]
    vecs[2, :H] = n(params['g1'])[0]
    vecs[3, :H] = n(params['be1'])[0]
    vecs[4, :F] = n(params['b1'])[0]
    vecs[5, :H] = n(params['b2'])[0]
    vecs[6, :H] = n(params['g2'])[0]
    vecs[7, :H] = n(params['be2'])[0]
    vecs[8, :lay.gg_pad] = -1e9          # padded head logits vanish under softmax
    vecs[8, :lay.gg] = n(params['bh'])[0]

    return {'wpack': jnp.asarray(wpack, jnp.bfloat16),
            'vecs': jnp.asarray(vecs, jnp.float32)}


def prepare_inputs(seqs, lay, max_length, action_num):
    """Host-side (numpy) construction of the per-call kernel inputs."""
    actions, masks = encode(seqs, max_length, action_num)
    ids = np.asarray(actions, np.int32)                      # (B, L)
    mask = np.asarray(masks, np.float32)                     # (B, L)
    B, L = ids.shape
    BL = B * L
    BPAD = _rup(max(B, 1), 8)                                # sublane-dense output

    # per flattened row: [token id, vpad + position] for the fused one-hot
    idx = np.zeros((BL, 2), np.int32)
    idx[:, 0] = ids.reshape(-1)
    idx[:, 1] = lay.vpad + np.tile(np.arange(L, dtype=np.int32), B)

    # block-diagonal attention bias merged with the key pad mask
    batch_of = np.repeat(np.arange(B, dtype=np.int32), L)    # (BL,)
    same = batch_of[:, None] == batch_of[None, :]
    keep = same & (mask.reshape(-1)[None, :] > 0.5)
    bias = np.where(keep, 0.0, -1e9).astype(np.float32)      # (BL, BL)

    # block-diagonal masked-mean pooling matrix (rows padded to 8)
    denom = np.maximum(mask.sum(axis=1), 1.0)                 # (B,)
    poolv = (mask / denom[:, None]).reshape(-1)               # (BL,)
    pool = np.zeros((BPAD, BL), np.float32)
    pool[batch_of, np.arange(BL)] = poolv

    return jnp.asarray(idx), jnp.asarray(bias), jnp.asarray(pool), B


@functools.partial(jax.jit, static_argnames=('lay', 'batch'))
def _run_kernel(idx, bias, pool, wpack, vecs, *, lay, batch):
    bpad = pool.shape[0]
    kernel = functools.partial(actor_kernel, lay=lay)
    vmem = pl.BlockSpec(memory_space=pltpu.MemorySpace.VMEM)
    # Everything fits VMEM at these shapes, so a single grid-less call is the
    # lowest-overhead design (grid steps cost ~0.35us each on v5e/v6e).  If B
    # or L grows, add grid=(B//TB,) with dimension_semantics=("parallel",) so
    # v7x's second TensorCore is used and the (BL, BL) scores / FFN working
    # set stays under v7x's smaller 64 MiB VMEM.
    out_pad = pl.pallas_call(
        kernel,
        out_shape=jax.ShapeDtypeStruct((bpad, lay.gg_pad), jnp.float32),
        in_specs=[vmem] * 5,
        out_specs=vmem,
    )(idx, bias, pool, wpack, vecs)
    return out_pad[:batch, :lay.gg]


def actor_forward(seqs, fused_params, lay, max_length, action_num):
    idx, bias, pool, batch = prepare_inputs(seqs, lay, max_length, action_num)
    return _run_kernel(idx, bias, pool, fused_params['wpack'],
                       fused_params['vecs'], lay=lay, batch=batch)


# ---------------------------------- main --------------------------------------

if __name__ == "__main__":
    GRID = 4          # -> grid*grid = 16 output classes
    MAX_LENGTH = 8
    ACTION_NUM = 16   # pad token id == ACTION_NUM, vocab = ACTION_NUM + 1
    HIDDEN = 32
    FFN = 64
    BATCH = 2

    lay = make_layout(ACTION_NUM, MAX_LENGTH, HIDDEN, FFN, GRID)

    key = jax.random.PRNGKey(0)
    pkey, skey = jax.random.split(key)
    params = init_params(pkey, ACTION_NUM, MAX_LENGTH, HIDDEN, FFN, GRID)
    fused_params = prepare_actor_params(params, lay)

    # deterministic variable-length action sequences (values in [0, ACTION_NUM))
    raw = jax.random.randint(skey, (BATCH, MAX_LENGTH), 0, ACTION_NUM)
    lengths = [5, 8]   # one padded, one full-length
    seqs = [list(map(int, raw[b, :lengths[b]])) for b in range(BATCH)]

    out = actor_forward(seqs, fused_params, lay, MAX_LENGTH, ACTION_NUM)
    out = jax.block_until_ready(out)

    assert out.shape == (BATCH, GRID * GRID)
    assert bool(jnp.all(jnp.isfinite(out)))
    # exact-divide output softmax: rows sum to 1 within f32 rounding
    assert bool(jnp.allclose(jnp.sum(out, axis=-1), 1.0, atol=1e-4))
    print("KERNEL_OK")
</pallas_src>

<mosaic_0001>
module attributes {stable_mosaic.version = 11 : i64} {
  func.func @actor_kernel(%arg0: memref<16x2xi32, #tpu.memory_space<vmem>>, %arg1: memref<16x16xf32, #tpu.memory_space<vmem>>, %arg2: memref<8x16xf32, #tpu.memory_space<vmem>>, %arg3: memref<320x384xbf16, #tpu.memory_space<vmem>>, %arg4: memref<16x384xf32, #tpu.memory_space<vmem>>, %arg5: memref<8x128xf32, #tpu.memory_space<vmem>>) attributes {dimension_semantics = [], scalar_prefetch = 0 : i64, scratch_operands = 0 : i64, tpu.core_type = #tpu.core_type<tc>} {
    %c0 = arith.constant 0 : index
    %c0_0 = arith.constant 0 : index
    %0 = vector.load %arg3[%c0, %c0_0] : memref<320x384xbf16, #tpu.memory_space<vmem>>, vector<32x32xbf16>
    %c32 = arith.constant 32 : index
    %c0_1 = arith.constant 0 : index
    %1 = vector.load %arg3[%c32, %c0_1] : memref<320x384xbf16, #tpu.memory_space<vmem>>, vector<32x384xbf16>
    %c64 = arith.constant 64 : index
    %c0_2 = arith.constant 0 : index
    %2 = vector.load %arg3[%c64, %c0_2] : memref<320x384xbf16, #tpu.memory_space<vmem>>, vector<128x32xbf16>
    %c192 = arith.constant 192 : index
    %c0_3 = arith.constant 0 : index
    %3 = vector.load %arg3[%c192, %c0_3] : memref<320x384xbf16, #tpu.memory_space<vmem>>, vector<32x64xbf16>
    %c224 = arith.constant 224 : index
    %c0_4 = arith.constant 0 : index
    %4 = vector.load %arg3[%c224, %c0_4] : memref<320x384xbf16, #tpu.memory_space<vmem>>, vector<64x32xbf16>
    %c288 = arith.constant 288 : index
    %c0_5 = arith.constant 0 : index
    %5 = vector.load %arg3[%c288, %c0_5] : memref<320x384xbf16, #tpu.memory_space<vmem>>, vector<32x128xbf16>
    %c0_6 = arith.constant 0 : index
    %c0_7 = arith.constant 0 : index
    %6 = vector.load %arg4[%c0_6, %c0_7] : memref<16x384xf32, #tpu.memory_space<vmem>>, vector<1x384xf32>
    %c1 = arith.constant 1 : index
    %c0_8 = arith.constant 0 : index
    %7 = vector.load %arg4[%c1, %c0_8] : memref<16x384xf32, #tpu.memory_space<vmem>>, vector<1x32xf32>
    %c2 = arith.constant 2 : index
    %c0_9 = arith.constant 0 : index
    %8 = vector.load %arg4[%c2, %c0_9] : memref<16x384xf32, #tpu.memory_space<vmem>>, vector<1x32xf32>
    %c3 = arith.constant 3 : index
    %c0_10 = arith.constant 0 : index
    %9 = vector.load %arg4[%c3, %c0_10] : memref<16x384xf32, #tpu.memory_space<vmem>>, vector<1x32xf32>
    %c4 = arith.constant 4 : index
    %c0_11 = arith.constant 0 : index
    %10 = vector.load %arg4[%c4, %c0_11] : memref<16x384xf32, #tpu.memory_space<vmem>>, vector<1x64xf32>
    %c5 = arith.constant 5 : index
    %c0_12 = arith.constant 0 : index
    %11 = vector.load %arg4[%c5, %c0_12] : memref<16x384xf32, #tpu.memory_space<vmem>>, vector<1x32xf32>
    %c6 = arith.constant 6 : index
    %c0_13 = arith.constant 0 : index
    %12 = vector.load %arg4[%c6, %c0_13] : memref<16x384xf32, #tpu.memory_space<vmem>>, vector<1x32xf32>
    %c7 = arith.constant 7 : index
    %c0_14 = arith.constant 0 : index
    %13 = vector.load %arg4[%c7, %c0_14] : memref<16x384xf32, #tpu.memory_space<vmem>>, vector<1x32xf32>
    %c8 = arith.constant 8 : index
    %c0_15 = arith.constant 0 : index
    %14 = vector.load %arg4[%c8, %c0_15] : memref<16x384xf32, #tpu.memory_space<vmem>>, vector<1x128xf32>
    %c0_16 = arith.constant 0 : index
    %c0_17 = arith.constant 0 : index
    %15 = vector.load %arg0[%c0_16, %c0_17] : memref<16x2xi32, #tpu.memory_space<vmem>>, vector<16x2xi32>
    %16 = tpu.iota {dimensions = array<i32: 1>} : vector<16x32xi32>
    %17 = vector.extract_strided_slice %15 {offsets = [0, 0], sizes = [16, 1], strides = [1, 1]} : vector<16x2xi32> to vector<16x1xi32>
    %18 = vector.broadcast %17 : vector<16x1xi32> to vector<16x32xi32>
    %19 = arith.cmpi eq, %16, %18 : vector<16x32xi32>
    %20 = vector.extract_strided_slice %15 {offsets = [0, 1], sizes = [16, 1], strides = [1, 1]} : vector<16x2xi32> to vector<16x1xi32>
    %21 = vector.broadcast %20 : vector<16x1xi32> to vector<16x32xi32>
    %22 = arith.cmpi eq, %16, %21 : vector<16x32xi32>
    %23 = arith.ori %19, %22 : vector<16x32xi1>
    %cst = arith.constant 1.000000e+00 : f32
    %cst_18 = arith.constant 0.000000e+00 : f32
    %24 = vector.broadcast %cst : f32 to vector<16x32xf32>
    %25 = vector.broadcast %cst_18 : f32 to vector<16x32xf32>
    %26 = arith.select %23, %24, %25 : vector<16x32xi1>, vector<16x32xf32>
    %27 = arith.truncf %26 : vector<16x32xf32> to vector<16x32xbf16>
    %cst_19 = arith.constant dense<0.000000e+00> : vector<16x32xf32>
    %28 = tpu.matmul %27, %0, %cst_19 {dimension_numbers = #tpu.dot_dimension_numbers<[1], [0], [0], [1], [0, 0, 1, 1], [], []>} : vector<16x32xbf16>, vector<32x32xbf16>, vector<16x32xf32> -> vector<16x32xf32>
    %29 = arith.truncf %28 : vector<16x32xf32> to vector<16x32xbf16>
    %cst_20 = arith.constant dense<0.000000e+00> : vector<16x384xf32>
    %30 = tpu.matmul %29, %1, %cst_20 {dimension_numbers = #tpu.dot_dimension_numbers<[1], [0], [0], [1], [0, 0, 1, 1], [], []>} : vector<16x32xbf16>, vector<32x384xbf16>, vector<16x384xf32> -> vector<16x384xf32>
    %31 = vector.broadcast %6 : vector<1x384xf32> to vector<16x384xf32>
    %32 = arith.addf %30, %31 : vector<16x384xf32>
    %33 = vector.extract_strided_slice %32 {offsets = [0, 0], sizes = [16, 128], strides = [1, 1]} : vector<16x384xf32> to vector<16x128xf32>
    %34 = vector.extract_strided_slice %32 {offsets = [0, 128], sizes = [16, 128], strides = [1, 1]} : vector<16x384xf32> to vector<16x128xf32>
    %35 = vector.extract_strided_slice %32 {offsets = [0, 256], sizes = [16, 128], strides = [1, 1]} : vector<16x384xf32> to vector<16x128xf32>
    %36 = arith.truncf %33 : vector<16x128xf32> to vector<16x128xbf16>
    %37 = arith.truncf %34 : vector<16x128xf32> to vector<16x128xbf16>
    %cst_21 = arith.constant dense<0.000000e+00> : vector<16x16xf32>
    %38 = tpu.matmul %36, %37, %cst_21 {dimension_numbers = #tpu.dot_dimension_numbers<[1], [1], [0], [0], [0, 0, 1, 0], [], []>} : vector<16x128xbf16>, vector<16x128xbf16>, vector<16x16xf32> -> vector<16x16xf32>
    %c0_22 = arith.constant 0 : index
    %c0_23 = arith.constant 0 : index
    %39 = vector.load %arg1[%c0_22, %c0_23] : memref<16x16xf32, #tpu.memory_space<vmem>>, vector<16x16xf32>
    %40 = arith.addf %38, %39 : vector<16x16xf32>
    %cst_24 = arith.constant dense<0xFF800000> : vector<16xf32>
    %41 = vector.multi_reduction <maximumf>, %40, %cst_24 [1] : vector<16x16xf32> to vector<16xf32>
    %42 = vector.shape_cast %41 : vector<16xf32> to vector<16x1xf32>
    %43 = vector.broadcast %42 : vector<16x1xf32> to vector<16x16xf32>
    %44 = arith.subf %40, %43 : vector<16x16xf32>
    %45 = math.exp %44 : vector<16x16xf32>
    %cst_25 = arith.constant dense<0.000000e+00> : vector<16xf32>
    %46 = vector.multi_reduction <add>, %45, %cst_25 [1] : vector<16x16xf32> to vector<16xf32>
    %47 = vector.shape_cast %46 : vector<16xf32> to vector<16x1xf32>
    %48 = tpu.reciprocal %47 {approx = true} : vector<16x1xf32> -> vector<16x1xf32>
    %49 = vector.broadcast %48 : vector<16x1xf32> to vector<16x16xf32>
    %50 = arith.mulf %45, %49 : vector<16x16xf32>
    %51 = arith.truncf %50 : vector<16x16xf32> to vector<16x16xbf16>
    %52 = arith.truncf %35 : vector<16x128xf32> to vector<16x128xbf16>
    %cst_26 = arith.constant dense<0.000000e+00> : vector<16x128xf32>
    %53 = tpu.matmul %51, %52, %cst_26 {dimension_numbers = #tpu.dot_dimension_numbers<[1], [0], [0], [1], [0, 0, 1, 1], [], []>} : vector<16x16xbf16>, vector<16x128xbf16>, vector<16x128xf32> -> vector<16x128xf32>
    %54 = arith.truncf %53 : vector<16x128xf32> to vector<16x128xbf16>
    %cst_27 = arith.constant dense<0.000000e+00> : vector<16x32xf32>
    %55 = tpu.matmul %54, %2, %cst_27 {dimension_numbers = #tpu.dot_dimension_numbers<[1], [0], [0], [1], [0, 0, 1, 1], [], []>} : vector<16x128xbf16>, vector<128x32xbf16>, vector<16x32xf32> -> vector<16x32xf32>
    %56 = vector.broadcast %7 : vector<1x32xf32> to vector<16x32xf32>
    %57 = arith.addf %55, %56 : vector<16x32xf32>
    %58 = arith.addf %28, %57 : vector<16x32xf32>
    %cst_28 = arith.constant dense<0.000000e+00> : vector<16xf32>
    %59 = vector.multi_reduction <add>, %58, %cst_28 [1] : vector<16x32xf32> to vector<16xf32>
    %60 = vector.shape_cast %59 : vector<16xf32> to vector<16x1xf32>
    %cst_29 = arith.constant 3.200000e+01 : f32
    %61 = vector.broadcast %cst_29 : f32 to vector<16x1xf32>
    %62 = arith.divf %60, %61 : vector<16x1xf32>
    %63 = vector.broadcast %62 : vector<16x1xf32> to vector<16x32xf32>
    %64 = arith.subf %58, %63 : vector<16x32xf32>
    %65 = arith.mulf %64, %64 : vector<16x32xf32>
    %cst_30 = arith.constant dense<0.000000e+00> : vector<16xf32>
    %66 = vector.multi_reduction <add>, %65, %cst_30 [1] : vector<16x32xf32> to vector<16xf32>
    %67 = vector.shape_cast %66 : vector<16xf32> to vector<16x1xf32>
    %cst_31 = arith.constant 3.200000e+01 : f32
    %68 = vector.broadcast %cst_31 : f32 to vector<16x1xf32>
    %69 = arith.divf %67, %68 : vector<16x1xf32>
    %70 = vector.broadcast %62 : vector<16x1xf32> to vector<16x32xf32>
    %71 = arith.subf %58, %70 : vector<16x32xf32>
    %cst_32 = arith.constant 9.99999974E-6 : f32
    %72 = vector.broadcast %cst_32 : f32 to vector<16x1xf32>
    %73 = arith.addf %69, %72 : vector<16x1xf32>
    %74 = math.rsqrt %73 : vector<16x1xf32>
    %75 = vector.broadcast %74 : vector<16x1xf32> to vector<16x32xf32>
    %76 = arith.mulf %71, %75 : vector<16x32xf32>
    %77 = vector.broadcast %8 : vector<1x32xf32> to vector<16x32xf32>
    %78 = arith.mulf %76, %77 : vector<16x32xf32>
    %79 = vector.broadcast %9 : vector<1x32xf32> to vector<16x32xf32>
    %80 = arith.addf %78, %79 : vector<16x32xf32>
    %81 = arith.truncf %80 : vector<16x32xf32> to vector<16x32xbf16>
    %cst_33 = arith.constant dense<0.000000e+00> : vector<16x64xf32>
    %82 = tpu.matmul %81, %3, %cst_33 {dimension_numbers = #tpu.dot_dimension_numbers<[1], [0], [0], [1], [0, 0, 1, 1], [], []>} : vector<16x32xbf16>, vector<32x64xbf16>, vector<16x64xf32> -> vector<16x64xf32>
    %83 = vector.broadcast %10 : vector<1x64xf32> to vector<16x64xf32>
    %84 = arith.addf %82, %83 : vector<16x64xf32>
    %85 = arith.mulf %84, %84 : vector<16x64xf32>
    %86 = arith.mulf %84, %85 : vector<16x64xf32>
    %cst_34 = arith.constant 4.471500e-02 : f32
    %87 = vector.broadcast %cst_34 : f32 to vector<16x64xf32>
    %88 = arith.mulf %87, %86 : vector<16x64xf32>
    %89 = arith.addf %84, %88 : vector<16x64xf32>
    %cst_35 = arith.constant 0.797884583 : f32
    %90 = vector.broadcast %cst_35 : f32 to vector<16x64xf32>
    %91 = arith.mulf %90, %89 : vector<16x64xf32>
    %92 = math.tanh %91 : vector<16x64xf32>
    %cst_36 = arith.constant 1.000000e+00 : f32
    %93 = vector.broadcast %cst_36 : f32 to vector<16x64xf32>
    %94 = arith.addf %93, %92 : vector<16x64xf32>
    %cst_37 = arith.constant 5.000000e-01 : f32
    %95 = vector.broadcast %cst_37 : f32 to vector<16x64xf32>
    %96 = arith.mulf %95, %94 : vector<16x64xf32>
    %97 = arith.mulf %84, %96 : vector<16x64xf32>
    %98 = arith.truncf %97 : vector<16x64xf32> to vector<16x64xbf16>
    %cst_38 = arith.constant dense<0.000000e+00> : vector<16x32xf32>
    %99 = tpu.matmul %98, %4, %cst_38 {dimension_numbers = #tpu.dot_dimension_numbers<[1], [0], [0], [1], [0, 0, 1, 1], [], []>} : vector<16x64xbf16>, vector<64x32xbf16>, vector<16x32xf32> -> vector<16x32xf32>
    %100 = vector.broadcast %11 : vector<1x32xf32> to vector<16x32xf32>
    %101 = arith.addf %99, %100 : vector<16x32xf32>
    %102 = arith.addf %80, %101 : vector<16x32xf32>
    %cst_39 = arith.constant dense<0.000000e+00> : vector<16xf32>
    %103 = vector.multi_reduction <add>, %102, %cst_39 [1] : vector<16x32xf32> to vector<16xf32>
    %104 = vector.shape_cast %103 : vector<16xf32> to vector<16x1xf32>
    %cst_40 = arith.constant 3.200000e+01 : f32
    %105 = vector.broadcast %cst_40 : f32 to vector<16x1xf32>
    %106 = arith.divf %104, %105 : vector<16x1xf32>
    %107 = vector.broadcast %106 : vector<16x1xf32> to vector<16x32xf32>
    %108 = arith.subf %102, %107 : vector<16x32xf32>
    %109 = arith.mulf %108, %108 : vector<16x32xf32>
    %cst_41 = arith.constant dense<0.000000e+00> : vector<16xf32>
    %110 = vector.multi_reduction <add>, %109, %cst_41 [1] : vector<16x32xf32> to vector<16xf32>
    %111 = vector.shape_cast %110 : vector<16xf32> to vector<16x1xf32>
    %cst_42 = arith.constant 3.200000e+01 : f32
    %112 = vector.broadcast %cst_42 : f32 to vector<16x1xf32>
    %113 = arith.divf %111, %112 : vector<16x1xf32>
    %114 = vector.broadcast %106 : vector<16x1xf32> to vector<16x32xf32>
    %115 = arith.subf %102, %114 : vector<16x32xf32>
    %cst_43 = arith.constant 9.99999974E-6 : f32
    %116 = vector.broadcast %cst_43 : f32 to vector<16x1xf32>
    %117 = arith.addf %113, %116 : vector<16x1xf32>
    %118 = math.rsqrt %117 : vector<16x1xf32>
    %119 = vector.broadcast %118 : vector<16x1xf32> to vector<16x32xf32>
    %120 = arith.mulf %115, %119 : vector<16x32xf32>
    %121 = vector.broadcast %12 : vector<1x32xf32> to vector<16x32xf32>
    %122 = arith.mulf %120, %121 : vector<16x32xf32>
    %123 = vector.broadcast %13 : vector<1x32xf32> to vector<16x32xf32>
    %124 = arith.addf %122, %123 : vector<16x32xf32>
    %c0_44 = arith.constant 0 : index
    %c0_45 = arith.constant 0 : index
    %125 = vector.load %arg2[%c0_44, %c0_45] : memref<8x16xf32, #tpu.memory_space<vmem>>, vector<8x16xf32>
    %126 = arith.truncf %125 : vector<8x16xf32> to vector<8x16xbf16>
    %127 = arith.truncf %124 : vector<16x32xf32> to vector<16x32xbf16>
    %cst_46 = arith.constant dense<0.000000e+00> : vector<8x32xf32>
    %128 = tpu.matmul %126, %127, %cst_46 {dimension_numbers = #tpu.dot_dimension_numbers<[1], [0], [0], [1], [0, 0, 1, 1], [], []>} : vector<8x16xbf16>, vector<16x32xbf16>, vector<8x32xf32> -> vector<8x32xf32>
    %129 = arith.truncf %128 : vector<8x32xf32> to vector<8x32xbf16>
    %cst_47 = arith.constant dense<0.000000e+00> : vector<8x128xf32>
    %130 = tpu.matmul %129, %5, %cst_47 {dimension_numbers = #tpu.dot_dimension_numbers<[1], [0], [0], [1], [0, 0, 1, 1], [], []>} : vector<8x32xbf16>, vector<32x128xbf16>, vector<8x128xf32> -> vector<8x128xf32>
    %131 = vector.broadcast %14 : vector<1x128xf32> to vector<8x128xf32>
    %132 = arith.addf %130, %131 : vector<8x128xf32>
    %cst_48 = arith.constant dense<0xFF800000> : vector<8xf32>
    %133 = vector.multi_reduction <maximumf>, %132, %cst_48 [1] : vector<8x128xf32> to vector<8xf32>
    %134 = vector.shape_cast %133 : vector<8xf32> to vector<8x1xf32>
    %135 = vector.broadcast %134 : vector<8x1xf32> to vector<8x128xf32>
    %136 = arith.subf %132, %135 : vector<8x128xf32>
    %137 = math.exp %136 : vector<8x128xf32>
    %cst_49 = arith.constant dense<0.000000e+00> : vector<8xf32>
    %138 = vector.multi_reduction <add>, %137, %cst_49 [1] : vector<8x128xf32> to vector<8xf32>
    %139 = vector.shape_cast %138 : vector<8xf32> to vector<8x1xf32>
    %140 = vector.broadcast %139 : vector<8x1xf32> to vector<8x128xf32>
    %141 = arith.divf %137, %140 : vector<8x128xf32>
    %c0_50 = arith.constant 0 : index
    %c0_51 = arith.constant 0 : index
    %142 = vector.load %arg5[%c0_50, %c0_51] : memref<8x128xf32, #tpu.memory_space<vmem>>, vector<8x128xf32>
    tpu.vector_store %arg5[%c0_50, %c0_51], %141 {strides = array<i32>} : memref<8x128xf32, #tpu.memory_space<vmem>>, vector<8x128xf32>,
    return
  }
}

</mosaic_0001>

<llo_original>
// kernel: _run_kernel.1
$region0: #{_run_kernel.1}
  #allocation0 [shape = 'u32[]', space=smem, size = 0x4, offset = 0x4, fixed_abs, tag = 'smem constant byte address 0x4 - core index']
  #allocation1 [shape = 'u32[144,128]{1,0:T(1,128)}', space=vmem, size = 0x12000, scoped, tag = 'internal scratch']
  %s0 = inlined_call_operand.vmem [shape: s32[16,2], index: 0, kind: input, shape index: {}]
  %s1 = inlined_call_operand.vmem [shape: f32[16,16], index: 1, kind: input, shape index: {}]
  %s2 = inlined_call_operand.vmem [shape: f32[8,16], index: 2, kind: input, shape index: {}]
  %s3 = inlined_call_operand.hbm [shape: bf16[320,384], index: 3, kind: input, shape index: {}]
  %s4 = inlined_call_operand.hbm [shape: f32[16,384], index: 4, kind: input, shape index: {}]
  %s5 = inlined_call_operand.vmem [shape: f32[8,128], index: 5, kind: output, shape index: {}]
  %s6 = sld [smem:[#allocation0]]
  $region38: #{_run_kernel.1} parent=0
    _
  %s8 = ssub.s32 1, %s6
  %s9 = scalar_select 0, %s8, %s6
  $region1: #{_run_kernel.1} parent=0
    #allocation2 [shape = 'u8[245760]{0}', space=vmem, size = 0x3c000, scoped, tag = 'input window, operand 3, single buffered']
    #allocation3 [shape = 's32[1]{0}', space=sflag, size = 0x4, scoped, tag = 'scoped memory for _run_kernel.1']
    #allocation4 [shape = 'u8[24576]{0}', space=vmem, size = 0x6000, scoped, tag = 'input window, operand 4, single buffered']
    #allocation5 [shape = 's32[1]{0}', space=sflag, size = 0x4, scoped, tag = 'scoped memory for _run_kernel.1']
    %10 = vsyncpa [#allocation3], 0
    %11 = vsyncpa [#allocation5], 0
    // Predicated region
    $region2: #{_run_kernel.1} parent=1 // pred_check
      _
    $region3: #{_run_kernel.1} parent=1 // pred_check_branch
      %13 = sbr.rel (0) target = $region5
    $region4: #{_run_kernel.1} parent=1 // pred_region
      _
    $region5: #{_run_kernel.1} parent=1 // pred_fallthru
      _
    // Predicated region
    $region6: #{_run_kernel.1} parent=1 // pred_check
      _
    $region7: #{_run_kernel.1} parent=1 // pred_check_branch
      %15 = sbr.rel (0) target = $region9
    $region8: #{_run_kernel.1} parent=1 // pred_region
      _
    $region9: #{_run_kernel.1} parent=1 // pred_fallthru
      _
    // Predicated region
    $region10: #{_run_kernel.1} parent=1 // pred_check
      _
    $region11: #{_run_kernel.1} parent=1 // pred_check_branch
      %17 = sbr.rel (0) target = $region13
    $region12: #{_run_kernel.1} parent=1 // pred_region
      _
    $region13: #{_run_kernel.1} parent=1 // pred_fallthru
      _
    // Predicated region
    $region14: #{_run_kernel.1} parent=1 // pred_check
      _
    $region15: #{_run_kernel.1} parent=1 // pred_check_branch
      %19 = sbr.rel (0) target = $region17
    $region16: #{_run_kernel.1} parent=1 // pred_region
      %s21 = ssub.s32 7680, 7680
      %22 = vsyncadd [#allocation3], %s21
      %s23 = sshll.u32 [#allocation2], 4
      %s24 = int_to_ptr.vmem [resolvable:$true] %s23
      %29 = dma.hbm_to_vmem [thread:$0]  %s3, 7680, %s24, [#allocation3], 192, 192, 12
    $region17: #{_run_kernel.1} parent=1 // pred_fallthru
      _
    // Predicated region
    $region18: #{_run_kernel.1} parent=1 // pred_check
      _
    $region19: #{_run_kernel.1} parent=1 // pred_check_branch
      %31 = sbr.rel (0) target = $region21
    $region20: #{_run_kernel.1} parent=1 // pred_region
      %s33 = ssub.s32 768, 768
      %34 = vsyncadd [#allocation5], %s33
      %s35 = sshll.u32 [#allocation4], 4
      %s36 = int_to_ptr.vmem [resolvable:$true] %s35
      %41 = dma.hbm_to_vmem [thread:$0]  %s4, 768, %s36, [#allocation5], 384, 384, 24
    $region21: #{_run_kernel.1} parent=1 // pred_fallthru
      _
    // Predicated region
    $region22: #{_run_kernel.1} parent=1 // pred_check
      _
    $region23: #{_run_kernel.1} parent=1 // pred_check_branch
      %43 = sbr.rel (0) target = $region25
    $region24: #{_run_kernel.1} parent=1 // pred_region
      %44 = dma.done [#allocation3], 7680
    $region25: #{_run_kernel.1} parent=1 // pred_fallthru
      _
    // Predicated region
    $region26: #{_run_kernel.1} parent=1 // pred_check
      _
    $region27: #{_run_kernel.1} parent=1 // pred_check_branch
      %46 = sbr.rel (0) target = $region29
    $region28: #{_run_kernel.1} parent=1 // pred_region
      %47 = dma.done [#allocation5], 768
    $region29: #{_run_kernel.1} parent=1 // pred_fallthru
      _
    %v49 = vld [vmem:[#allocation2] sm:$0xf]
    %v50 = vld [vmem:[#allocation2 + $0xc] sm:$0xf]
    %v51 = vld [vmem:[#allocation2 + $0x18] sm:$0xf]
    %v52 = vld [vmem:[#allocation2 + $0x24] sm:$0xf]
    %v53 = vld [vmem:[#allocation2 + $0x30] sm:$0xff]
    %v54 = vld [vmem:[#allocation2 + $0x38] sm:$0xf]
    %v55 = vld [vmem:[#allocation2 + $0x3c] sm:$0xff]
    %v56 = vld [vmem:[#allocation2 + $0x44] sm:$0xf]
    %v57 = vld [vmem:[#allocation2 + $0x48] sm:$0xff]
    %v58 = vld [vmem:[#allocation2 + $0x50] sm:$0xf]
    %v59 = vld [vmem:[#allocation2 + $0x54] sm:$0xff]
    %v60 = vld [vmem:[#allocation2 + $0x5c] sm:$0xf]
    %v61 = vld [vmem:[#allocation2 + $0x60] sm:$0xf]
    %v62 = vld [vmem:[#allocation2 + $0x6c] sm:$0xf]
    %v63 = vld [vmem:[#allocation2 + $0x78] sm:$0xf]
    %v64 = vld [vmem:[#allocation2 + $0x84] sm:$0xf]
    %v65 = vld [vmem:[#allocation2 + $0x90] sm:$0xf]
    %v66 = vld [vmem:[#allocation2 + $0x9c] sm:$0xf]
    %v67 = vld [vmem:[#allocation2 + $0xa8] sm:$0xf]
    %v68 = vld [vmem:[#allocation2 + $0xb4] sm:$0xf]
    %v69 = vld [vmem:[#allocation2 + $0xc0] sm:$0xf]
    %v70 = vld [vmem:[#allocation2 + $0xcc] sm:$0xf]
    %v71 = vld [vmem:[#allocation2 + $0xd8] sm:$0xf]
    %v72 = vld [vmem:[#allocation2 + $0xe4] sm:$0xf]
    %v73 = vld [vmem:[#allocation2 + $0xf0] sm:$0xf]
    %v74 = vld [vmem:[#allocation2 + $0xfc] sm:$0xf]
    %v75 = vld [vmem:[#allocation2 + $0x108] sm:$0xf]
    %v76 = vld [vmem:[#allocation2 + $0x114] sm:$0xf]
    %v77 = vld [vmem:[#allocation2 + $0x120] sm:$0xf]
    %v78 = vld [vmem:[#allocation2 + $0x12c] sm:$0xf]
    %v79 = vld [vmem:[#allocation2 + $0x138] sm:$0xf]
    %v80 = vld [vmem:[#allocation2 + $0x144] sm:$0xf]
    %v81 = vld [vmem:[#allocation2 + $0x150] sm:$0xf]
    %v82 = vld [vmem:[#allocation2 + $0x15c] sm:$0xf]
    %v83 = vld [vmem:[#allocation2 + $0x168] sm:$0xf]
    %v84 = vld [vmem:[#allocation2 + $0x174] sm:$0xf]
    %v85 = vld [vmem:[#allocation2 + $0x180] sm:$0xf]
    %v86 = vld [vmem:[#allocation2 + $0x18c] sm:$0xf]
    %v87 = vld [vmem:[#allocation2 + $0x198] sm:$0xf]
    %v88 = vld [vmem:[#allocation2 + $0x1a4] sm:$0xf]
    %v89 = vld [vmem:[#allocation2 + $0x1b0] sm:$0xf]
    %v90 = vld [vmem:[#allocation2 + $0x1bc] sm:$0xf]
    %v91 = vld [vmem:[#allocation2 + $0x1c8] sm:$0xf]
    %v92 = vld [vmem:[#allocation2 + $0x1d4] sm:$0xf]
    %v93 = vld [vmem:[#allocation4] ss:$8 sm:$0x7]
    %v94 = vld [vmem:[#allocation4 + $0x1] ss:$0 sm:$0xff]
    %v95 = vld [vmem:[#allocation4 + $0x2] ss:$0 sm:$0xff]
    %v96 = vld [vmem:[#allocation4 + $0x3] ss:$0 sm:$0xff]
    %v97 = vld [vmem:[#allocation4 + $0x4] ss:$0 sm:$0xff]
    %v98 = vld [vmem:[#allocation4 + $0x5] ss:$0 sm:$0xff]
    %v99 = vld [vmem:[#allocation4 + $0x6] ss:$0 sm:$0xff]
    %v100 = vld [vmem:[#allocation4 + $0x7] ss:$0 sm:$0xff]
    %v101 = vld [vmem:[#allocation4 + $0x18] ss:$0 sm:$0xff]
    %v102 = vld [vmem:[%s0] sm:$0xff]
    %v103 = vld [vmem:[%s0 + $0x8] sm:$0xff]
    %v104 = vlaneseq
    %v105 = vand.u32 %v104, 127
    %106 = vset.pattern.permute.xlu0 0
    %107 = vperm.xlu0 %106, %v102
    %v108 = vpop.permute.xlu0 %107
    %109 = vset.pattern.permute.xlu0 0
    %110 = vperm.xlu0 %109, %v103
    %v111 = vpop.permute.xlu0 %110
    %vm112 = vcmp.eq.s32.totalorder %v105, %v108
    %vm113 = vcmp.eq.s32.totalorder %v105, %v111
    %114 = vset.pattern.permute.xlu0 1
    %115 = vperm.xlu0 %114, %v102
    %v116 = vpop.permute.xlu0 %115
    %117 = vset.pattern.permute.xlu0 1
    %118 = vperm.xlu0 %117, %v103
    %v119 = vpop.permute.xlu0 %118
    %vm120 = vcmp.eq.s32.totalorder %v105, %v116
    %vm121 = vcmp.eq.s32.totalorder %v105, %v119
    %vm122 = vmor %vm112, %vm120
    %vm123 = vmor %vm113, %vm121
    %v124 = vsel %vm122, 1.0, 0.0
    %v125 = vsel %vm123, 1.0, 0.0
    %v126 = vpack.c.bf16 %v125, %v124
    %v131 = vunpack.c.l.b16 %v49
    %v132 = vunpack.c.l.b16 %v50
    %v133 = vunpack.c.l.b16 %v51
    %v134 = vunpack.c.l.b16 %v52
    %v135 = vpack.c.b16 %v132, %v131
    %v136 = vpack.c.b16 %v134, %v133
    %vm139 = vcmask 261120
    %v141 = vsel %vm139, %v126, 0
    %143 = vmatprep.subr.bf16.mxu0 0
    %144 = vmatpush1.bf16.msra.mxu0 %v135
    %145 = vmatprep.subr.bf16.mxu0 0
    %146 = vmatpush1.bf16.msra.mxu0 %v136
    %147 = vmatprep.subr.bf16.mxu0 0
    %148 = vmatpush1.bf16.msra.mxu0 0
    %149 = vmatprep.subr.bf16.mxu0 0
    %150 = vmatpush1.bf16.msra.mxu0 0
    %151 = vmatprep.subr.bf16.mxu0 0
    %152 = vmatpush1.bf16.msra.mxu0 0
    %153 = vmatprep.subr.bf16.mxu0 0
    %154 = vmatpush1.bf16.msra.mxu0 0
    %155 = vmatprep.subr.bf16.mxu0 0
    %156 = vmatpush1.bf16.msra.mxu0 0
    %157 = vmatprep.subr.bf16.mxu0 0
    %158 = vmatpush1.bf16.msra.mxu0 0
    %159 = vmatprep.subr.bf16.mxu0 0
    %160 = vmatpush1.bf16.msra.mxu0 0
    %161 = vmatprep.subr.bf16.mxu0 0
    %162 = vmatpush1.bf16.msra.mxu0 0
    %163 = vmatprep.subr.bf16.mxu0 0
    %164 = vmatpush1.bf16.msra.mxu0 0
    %165 = vmatprep.subr.bf16.mxu0 0
    %166 = vmatpush1.bf16.msra.mxu0 0
    %167 = vmatprep.subr.bf16.mxu0 0
    %168 = vmatpush1.bf16.msra.mxu0 0
    %169 = vmatprep.subr.bf16.mxu0 0
    %170 = vmatpush1.bf16.msra.mxu0 0
    %171 = vmatprep.subr.bf16.mxu0 0
    %172 = vmatpush1.bf16.msra.mxu0 0
    %173 = vmatprep.subr.bf16.mxu0 0
    %174 = vmatpush1.bf16.msra.mxu0 0
    %175 = vmatprep.mubr.bf16.mxu0 0
    %176 = vmatmul.mubr.bf16.gmra.mrb[0].mxu0 %v141
    %v177 = vpop.f32.mrb[0].mxu0
    %v178 = vadd.f32 0.0, %v177
    %v179 = vpop.f32.mrb[0].mxu0
    %v180 = vpop.f32.mrb[0].mxu0
    %v181 = vadd.f32 0.0, %v180
    %v182 = vpop.f32.mrb[0].mxu0
    %183 = vdwg.mxu0
    %v184 = vpack.c.bf16 %v181, %v178
    %v186 = vlaneseq
    %v187 = vshrl.u32 %v186, 7
    %v188 = vsub.s32 0, %v187
    %v189 = vrot.slane %v93, %v188
    %v190 = vlaneseq
    %v191 = vshrl.u32 %v190, 7
    %v192 = vsub.s32 1, %v191
    %v193 = vrot.slane %v93, %v192
    %v194 = vlaneseq
    %v195 = vshrl.u32 %v194, 7
    %v196 = vsub.s32 2, %v195
    %v197 = vrot.slane %v93, %v196
    %v209 = vunpack.c.l.b16 %v53
    %v210 = vunpack.c.h.b16 %v53
    %v211 = vunpack.c.l.b16 %v54
    %v212 = vunpack.c.l.b16 %v55
    %v213 = vunpack.c.h.b16 %v55
    %v214 = vunpack.c.l.b16 %v56
    %v215 = vunpack.c.l.b16 %v57
    %v216 = vunpack.c.h.b16 %v57
    %v217 = vunpack.c.l.b16 %v58
    %v218 = vunpack.c.l.b16 %v59
    %v219 = vunpack.c.h.b16 %v59
    %v220 = vunpack.c.l.b16 %v60
    %v221 = vpack.c.b16 %v212, %v209
    %v222 = vpack.c.b16 %v213, %v210
    %v223 = vpack.c.b16 %v214, %v211
    %v224 = vpack.c.b16 %v218, %v215
    %v225 = vpack.c.b16 %v219, %v216
    %v226 = vpack.c.b16 %v220, %v217
    %v234 = vsel %vm139, %v184, 0
    %236 = vmatprep.subr.bf16.mxu0 %v222
    %237 = vmatpush1.bf16.msra.mxu0 %v221
    %238 = vmatprep.subr.bf16.mxu0 %v225
    %239 = vmatpush1.bf16.msra.mxu0 %v224
    %240 = vmatprep.subr.bf16.mxu0 0
    %241 = vmatpush1.bf16.msra.mxu0 0
    %242 = vmatprep.subr.bf16.mxu0 0
    %243 = vmatpush1.bf16.msra.mxu0 0
    %244 = vmatprep.subr.bf16.mxu0 0
    %245 = vmatpush1.bf16.msra.mxu0 0
    %246 = vmatprep.subr.bf16.mxu0 0
    %247 = vmatpush1.bf16.msra.mxu0 0
    %248 = vmatprep.subr.bf16.mxu0 0
    %249 = vmatpush1.bf16.msra.mxu0 0
    %250 = vmatprep.subr.bf16.mxu0 0
    %251 = vmatpush1.bf16.msra.mxu0 0
    %252 = vmatprep.subr.bf16.mxu0 0
    %253 = vmatpush1.bf16.msra.mxu0 0
    %254 = vmatprep.subr.bf16.mxu0 0
    %255 = vmatpush1.bf16.msra.mxu0 0
    %256 = vmatprep.subr.bf16.mxu0 0
    %257 = vmatpush1.bf16.msra.mxu0 0
    %258 = vmatprep.subr.bf16.mxu0 0
    %259 = vmatpush1.bf16.msra.mxu0 0
    %260 = vmatprep.subr.bf16.mxu0 0
    %261 = vmatpush1.bf16.msra.mxu0 0
    %262 = vmatprep.subr.bf16.mxu0 0
    %263 = vmatpush1.bf16.msra.mxu0 0
    %264 = vmatprep.subr.bf16.mxu0 0
    %265 = vmatpush1.bf16.msra.mxu0 0
    %266 = vmatprep.subr.bf16.mxu0 0
    %267 = vmatpush1.bf16.msra.mxu0 0
    %268 = vmatprep.mubr.bf16.mxu0 0
    %269 = vmatmul.mubr.bf16.gmra.mrb[0].mxu0 %v234
    %v270 = vpop.f32.mrb[0].mxu0
    %v271 = vadd.f32 %v189, %v270
    %v272 = vpop.f32.mrb[0].mxu0
    %v273 = vadd.f32 %v193, %v272
    %v274 = vpop.f32.mrb[0].mxu0
    %v275 = vadd.f32 %v189, %v274
    %v276 = vpop.f32.mrb[0].mxu0
    %v277 = vadd.f32 %v193, %v276
    %278 = vdwg.mxu0
    %279 = vmatprep.subr.bf16.mxu0 0
    %280 = vmatpush1.bf16.msra.mxu0 %v223
    %281 = vmatprep.subr.bf16.mxu0 0
    %282 = vmatpush1.bf16.msra.mxu0 %v226
    %283 = vmatprep.subr.bf16.mxu0 0
    %284 = vmatpush1.bf16.msra.mxu0 0
    %285 = vmatprep.subr.bf16.mxu0 0
    %286 = vmatpush1.bf16.msra.mxu0 0
    %287 = vmatprep.subr.bf16.mxu0 0
    %288 = vmatpush1.bf16.msra.mxu0 0
    %289 = vmatprep.subr.bf16.mxu0 0
    %290 = vmatpush1.bf16.msra.mxu0 0
    %291 = vmatprep.subr.bf16.mxu0 0
    %292 = vmatpush1.bf16.msra.mxu0 0
    %293 = vmatprep.subr.bf16.mxu0 0
    %294 = vmatpush1.bf16.msra.mxu0 0
    %295 = vmatprep.subr.bf16.mxu0 0
    %296 = vmatpush1.bf16.msra.mxu0 0
    %297 = vmatprep.subr.bf16.mxu0 0
    %298 = vmatpush1.bf16.msra.mxu0 0
    %299 = vmatprep.subr.bf16.mxu0 0
    %300 = vmatpush1.bf16.msra.mxu0 0
    %301 = vmatprep.subr.bf16.mxu0 0
    %302 = vmatpush1.bf16.msra.mxu0 0
    %303 = vmatprep.subr.bf16.mxu0 0
    %304 = vmatpush1.bf16.msra.mxu0 0
    %305 = vmatprep.subr.bf16.mxu0 0
    %306 = vmatpush1.bf16.msra.mxu0 0
    %307 = vmatprep.subr.bf16.mxu0 0
    %308 = vmatpush1.bf16.msra.mxu0 0
    %309 = vmatprep.subr.bf16.mxu0 0
    %310 = vmatpush1.bf16.msra.mxu0 0
    %311 = vmatprep.mubr.bf16.mxu0 0
    %312 = vmatmul.mubr.bf16.gmra.mrb[0].mxu0 %v234
    %v313 = vpop.f32.mrb[0].mxu0
    %v314 = vadd.f32 %v197, %v313
    %v315 = vpop.f32.mrb[0].mxu0
    %v316 = vpop.f32.mrb[0].mxu0
    %v317 = vadd.f32 %v197, %v316
    %v318 = vpop.f32.mrb[0].mxu0
    %319 = vdwg.mxu0
    %v320 = vpack.c.bf16 %v275, %v271
    %v321 = vpack.c.bf16 %v277, %v273
    %v322 = vld [vmem:[%s1] sm:$0xff]
    %v323 = vld [vmem:[%s1 + $0x8] sm:$0xff]
    %324 = vmatprep.subr.bf16.mxu0 0
    %325 = vmatpush1.bf16.xpose.msra.mxu0 %v321
    %326 = vmatprep.subr.bf16.mxu0 0
    %327 = vmatpush1.bf16.xpose.msra.mxu0 0
    %328 = vmatprep.subr.bf16.mxu0 0
    %329 = vmatpush1.bf16.xpose.msra.mxu0 0
    %330 = vmatprep.subr.bf16.mxu0 0
    %331 = vmatpush1.bf16.xpose.msra.mxu0 0
    %332 = vmatprep.subr.bf16.mxu0 0
    %333 = vmatpush1.bf16.xpose.msra.mxu0 0
    %334 = vmatprep.subr.bf16.mxu0 0
    %335 = vmatpush1.bf16.xpose.msra.mxu0 0
    %336 = vmatprep.subr.bf16.mxu0 0
    %337 = vmatpush1.bf16.xpose.msra.mxu0 0
    %338 = vmatprep.subr.bf16.mxu0 0
    %339 = vmatpush1.bf16.xpose.msra.mxu0 0
    %340 = vmatprep.subr.bf16.mxu0 0
    %341 = vmatpush1.bf16.xpose.msra.mxu0 0
    %342 = vmatprep.subr.bf16.mxu0 0
    %343 = vmatpush1.bf16.xpose.msra.mxu0 0
    %344 = vmatprep.subr.bf16.mxu0 0
    %345 = vmatpush1.bf16.xpose.msra.mxu0 0
    %346 = vmatprep.subr.bf16.mxu0 0
    %347 = vmatpush1.bf16.xpose.msra.mxu0 0
    %348 = vmatprep.subr.bf16.mxu0 0
    %349 = vmatpush1.bf16.xpose.msra.mxu0 0
    %350 = vmatprep.subr.bf16.mxu0 0
    %351 = vmatpush1.bf16.xpose.msra.mxu0 0
    %352 = vmatprep.subr.bf16.mxu0 0
    %353 = vmatpush1.bf16.xpose.msra.mxu0 0
    %354 = vmatprep.subr.bf16.mxu0 0
    %355 = vmatpush1.bf16.xpose.msra.mxu0 0
    %356 = vmatprep.mubr.bf16.mxu0 0
    %357 = vmatmul.mubr.bf16.gmra.mrb[0].mxu0 %v320
    %v358 = vpop.f32.mrb[0].mxu0
    %v359 = vadd.f32 %v322, %v358
    %v360 = vpop.f32.mrb[0].mxu0
    %v361 = vpop.f32.mrb[0].mxu0
    %v362 = vadd.f32 %v323, %v361
    %v363 = vpop.f32.mrb[0].mxu0
    %364 = vdwg.mxu0
    %vm365 = vcmask 130048
    %v366 = vsel %vm365, %v359, -inf
    %367 = vmax.xlane.f32.xlu0 %v366
    %v368 = vpop.xlane.xlu0 %367
    %v369 = vsel %vm365, %v362, -inf
    %370 = vmax.xlane.f32.xlu0 %v369
    %v371 = vpop.xlane.xlu0 %370
    %v372 = vsub.f32 %v359, %v368
    %v373 = vsub.f32 %v362, %v371
    %v374 = vmul.f32 %v372, 1.442695
    %v375 = vpow.pop %v374
    %v376 = vmul.f32 %v373, 1.442695
    %v377 = vpow.pop %v376
    %v378 = vsel %vm365, %v375, 0.0
    %379 = vadd.xlane.f32.xlu0 %v378
    %v380 = vpop.xlane.xlu0 %379
    %v381 = vsel %vm365, %v377, 0.0
    %382 = vadd.xlane.f32.xlu0 %v381
    %v383 = vpop.xlane.xlu0 %382
    %v384 = vrcp.pop %v380
    %v385 = vrcp.pop %v383
    %v386 = vmul.f32 %v375, %v384
    %v387 = vmul.f32 %v377, %v385
    %v388 = vpack.c.bf16 %v387, %v386
    %v389 = vpack.c.bf16 %v317, %v314
    %v391 = vsel %vm365, %v388, 0
    %393 = vmatprep.subr.bf16.mxu0 0
    %394 = vmatpush1.bf16.msra.mxu0 %v389
    %395 = vmatprep.subr.bf16.mxu0 0
    %396 = vmatpush1.bf16.msra.mxu0 0
    %397 = vmatprep.subr.bf16.mxu0 0
    %398 = vmatpush1.bf16.msra.mxu0 0
    %399 = vmatprep.subr.bf16.mxu0 0
    %400 = vmatpush1.bf16.msra.mxu0 0
    %401 = vmatprep.subr.bf16.mxu0 0
    %402 = vmatpush1.bf16.msra.mxu0 0
    %403 = vmatprep.subr.bf16.mxu0 0
    %404 = vmatpush1.bf16.msra.mxu0 0
    %405 = vmatprep.subr.bf16.mxu0 0
    %406 = vmatpush1.bf16.msra.mxu0 0
    %407 = vmatprep.subr.bf16.mxu0 0
    %408 = vmatpush1.bf16.msra.mxu0 0
    %409 = vmatprep.subr.bf16.mxu0 0
    %410 = vmatpush1.bf16.msra.mxu0 0
    %411 = vmatprep.subr.bf16.mxu0 0
    %412 = vmatpush1.bf16.msra.mxu0 0
    %413 = vmatprep.subr.bf16.mxu0 0
    %414 = vmatpush1.bf16.msra.mxu0 0
    %415 = vmatprep.subr.bf16.mxu0 0
    %416 = vmatpush1.bf16.msra.mxu0 0
    %417 = vmatprep.subr.bf16.mxu0 0
    %418 = vmatpush1.bf16.msra.mxu0 0
    %419 = vmatprep.subr.bf16.mxu0 0
    %420 = vmatpush1.bf16.msra.mxu0 0
    %421 = vmatprep.subr.bf16.mxu0 0
    %422 = vmatpush1.bf16.msra.mxu0 0
    %423 = vmatprep.subr.bf16.mxu0 0
    %424 = vmatpush1.bf16.msra.mxu0 0
    %425 = vmatprep.mubr.bf16.mxu0 0
    %426 = vmatmul.mubr.bf16.gmra.mrb[0].mxu0 %v391
    %v427 = vpop.f32.mrb[0].mxu0
    %v428 = vadd.f32 0.0, %v427
    %v429 = vpop.f32.mrb[0].mxu0
    %v430 = vpop.f32.mrb[0].mxu0
    %v431 = vadd.f32 0.0, %v430
    %v432 = vpop.f32.mrb[0].mxu0
    %433 = vdwg.mxu0
    %v434 = vpack.c.bf16 %v431, %v428
    %v451 = vunpack.c.l.b16 %v61
    %v452 = vunpack.c.l.b16 %v62
    %v453 = vunpack.c.l.b16 %v63
    %v454 = vunpack.c.l.b16 %v64
    %v455 = vunpack.c.l.b16 %v65
    %v456 = vunpack.c.l.b16 %v66
    %v457 = vunpack.c.l.b16 %v67
    %v458 = vunpack.c.l.b16 %v68
    %v459 = vunpack.c.l.b16 %v69
    %v460 = vunpack.c.l.b16 %v70
    %v461 = vunpack.c.l.b16 %v71
    %v462 = vunpack.c.l.b16 %v72
    %v463 = vunpack.c.l.b16 %v73
    %v464 = vunpack.c.l.b16 %v74
    %v465 = vunpack.c.l.b16 %v75
    %v466 = vunpack.c.l.b16 %v76
    %v467 = vpack.c.b16 %v452, %v451
    %v468 = vpack.c.b16 %v454, %v453
    %v469 = vpack.c.b16 %v456, %v455
    %v470 = vpack.c.b16 %v458, %v457
    %v471 = vpack.c.b16 %v460, %v459
    %v472 = vpack.c.b16 %v462, %v461
    %v473 = vpack.c.b16 %v464, %v463
    %v474 = vpack.c.b16 %v466, %v465
    %483 = vmatprep.subr.bf16.mxu0 0
    %484 = vmatpush1.bf16.msra.mxu0 %v467
    %485 = vmatprep.subr.bf16.mxu0 0
    %486 = vmatpush1.bf16.msra.mxu0 %v468
    %487 = vmatprep.subr.bf16.mxu0 0
    %488 = vmatpush1.bf16.msra.mxu0 %v469
    %489 = vmatprep.subr.bf16.mxu0 0
    %490 = vmatpush1.bf16.msra.mxu0 %v470
    %491 = vmatprep.subr.bf16.mxu0 0
    %492 = vmatpush1.bf16.msra.mxu0 %v471
    %493 = vmatprep.subr.bf16.mxu0 0
    %494 = vmatpush1.bf16.msra.mxu0 %v472
    %495 = vmatprep.subr.bf16.mxu0 0
    %496 = vmatpush1.bf16.msra.mxu0 %v473
    %497 = vmatprep.subr.bf16.mxu0 0
    %498 = vmatpush1.bf16.msra.mxu0 %v474
    %499 = vmatprep.subr.bf16.mxu0 0
    %500 = vmatpush1.bf16.msra.mxu0 0
    %501 = vmatprep.subr.bf16.mxu0 0
    %502 = vmatpush1.bf16.msra.mxu0 0
    %503 = vmatprep.subr.bf16.mxu0 0
    %504 = vmatpush1.bf16.msra.mxu0 0
    %505 = vmatprep.subr.bf16.mxu0 0
    %506 = vmatpush1.bf16.msra.mxu0 0
    %507 = vmatprep.subr.bf16.mxu0 0
    %508 = vmatpush1.bf16.msra.mxu0 0
    %509 = vmatprep.subr.bf16.mxu0 0
    %510 = vmatpush1.bf16.msra.mxu0 0
    %511 = vmatprep.subr.bf16.mxu0 0
    %512 = vmatpush1.bf16.msra.mxu0 0
    %513 = vmatprep.subr.bf16.mxu0 0
    %514 = vmatpush1.bf16.msra.mxu0 0
    %515 = vmatprep.mubr.bf16.mxu0 0
    %516 = vmatmul.mubr.bf16.gmra.mrb[0].mxu0 %v434
    %v517 = vpop.f32.mrb[0].mxu0
    %v518 = vadd.f32 %v94, %v517
    %v519 = vpop.f32.mrb[0].mxu0
    %v520 = vpop.f32.mrb[0].mxu0
    %v521 = vadd.f32 %v94, %v520
    %v522 = vpop.f32.mrb[0].mxu0
    %523 = vdwg.mxu0
    %v524 = vadd.f32 %v178, %v518
    %v525 = vadd.f32 %v181, %v521
    %v526 = vsel %vm139, %v524, 0.0
    %527 = vadd.xlane.f32.xlu0 %v526
    %v528 = vpop.xlane.xlu0 %527
    %v529 = vsel %vm139, %v525, 0.0
    %530 = vadd.xlane.f32.xlu0 %v529
    %v531 = vpop.xlane.xlu0 %530
    %v532 = vrcp.pop 32.0
    %v533 = vmul.f32 %v528, %v532
    %v534 = vmul.f32 %v531, %v532
    %v535 = vsub.f32 %v524, %v533
    %v536 = vsub.f32 %v525, %v534
    %v537 = vmul.f32 %v535, %v535
    %v538 = vmul.f32 %v536, %v536
    %v539 = vsel %vm139, %v537, 0.0
    %540 = vadd.xlane.f32.xlu0 %v539
    %v541 = vpop.xlane.xlu0 %540
    %v542 = vsel %vm139, %v538, 0.0
    %543 = vadd.xlane.f32.xlu0 %v542
    %v544 = vpop.xlane.xlu0 %543
    %v545 = vmul.f32 %v541, %v532
    %v546 = vmul.f32 %v544, %v532
    %v547 = vadd.f32 %v545, 1e-05
    %v548 = vadd.f32 %v546, 1e-05
    %v549 = vrsqrt.pop %v547
    %v550 = vrsqrt.pop %v548
    %v551 = vmul.f32 %v535, %v549
    %v552 = vmul.f32 %v536, %v550
    %v553 = vmul.f32 %v551, %v95
    %v554 = vmul.f32 %v552, %v95
    %v555 = vadd.f32 %v553, %v96
    %v556 = vadd.f32 %v554, %v96
    %v557 = vpack.c.bf16 %v556, %v555
    %v562 = vunpack.c.l.b16 %v77
    %v563 = vunpack.c.l.b16 %v78
    %v564 = vunpack.c.l.b16 %v79
    %v565 = vunpack.c.l.b16 %v80
    %v566 = vpack.c.b16 %v563, %v562
    %v567 = vpack.c.b16 %v565, %v564
    %v571 = vsel %vm139, %v557, 0
    %573 = vmatprep.subr.bf16.mxu0 0
    %574 = vmatpush1.bf16.msra.mxu0 %v566
    %575 = vmatprep.subr.bf16.mxu0 0
    %576 = vmatpush1.bf16.msra.mxu0 %v567
    %577 = vmatprep.subr.bf16.mxu0 0
    %578 = vmatpush1.bf16.msra.mxu0 0
    %579 = vmatprep.subr.bf16.mxu0 0
    %580 = vmatpush1.bf16.msra.mxu0 0
    %581 = vmatprep.subr.bf16.mxu0 0
    %582 = vmatpush1.bf16.msra.mxu0 0
    %583 = vmatprep.subr.bf16.mxu0 0
    %584 = vmatpush1.bf16.msra.mxu0 0
    %585 = vmatprep.subr.bf16.mxu0 0
    %586 = vmatpush1.bf16.msra.mxu0 0
    %587 = vmatprep.subr.bf16.mxu0 0
    %588 = vmatpush1.bf16.msra.mxu0 0
    %589 = vmatprep.subr.bf16.mxu0 0
    %590 = vmatpush1.bf16.msra.mxu0 0
    %591 = vmatprep.subr.bf16.mxu0 0
    %592 = vmatpush1.bf16.msra.mxu0 0
    %593 = vmatprep.subr.bf16.mxu0 0
    %594 = vmatpush1.bf16.msra.mxu0 0
    %595 = vmatprep.subr.bf16.mxu0 0
    %596 = vmatpush1.bf16.msra.mxu0 0
    %597 = vmatprep.subr.bf16.mxu0 0
    %598 = vmatpush1.bf16.msra.mxu0 0
    %599 = vmatprep.subr.bf16.mxu0 0
    %600 = vmatpush1.bf16.msra.mxu0 0
    %601 = vmatprep.subr.bf16.mxu0 0
    %602 = vmatpush1.bf16.msra.mxu0 0
    %603 = vmatprep.subr.bf16.mxu0 0
    %604 = vmatpush1.bf16.msra.mxu0 0
    %605 = vmatprep.mubr.bf16.mxu0 0
    %606 = vmatmul.mubr.bf16.gmra.mrb[0].mxu0 %v571
    %v607 = vpop.f32.mrb[0].mxu0
    %v608 = vadd.f32 %v97, %v607
    %v609 = vpop.f32.mrb[0].mxu0
    %v610 = vpop.f32.mrb[0].mxu0
    %v611 = vadd.f32 %v97, %v610
    %v612 = vpop.f32.mrb[0].mxu0
    %613 = vdwg.mxu0
    %v614 = vmul.f32 %v608, %v608
    %v615 = vmul.f32 %v611, %v611
    %v616 = vmul.f32 %v608, %v614
    %v617 = vmul.f32 %v611, %v615
    %v618 = vmul.f32 %v616, 0.044715
    %v619 = vmul.f32 %v617, 0.044715
    %v620 = vadd.f32 %v608, %v618
    %v621 = vadd.f32 %v611, %v619
    %v622 = vmul.f32 %v620, 0.7978846
    %v623 = vmul.f32 %v621, 0.7978846
    %v624 = vtanh.pop %v622
    %v625 = vtanh.pop %v623
    %v626 = vadd.f32 %v624, 1.0
    %v627 = vadd.f32 %v625, 1.0
    %v628 = vmul.f32 %v626, 0.5
    %v629 = vmul.f32 %v627, 0.5
    %v630 = vmul.f32 %v608, %v628
    %v631 = vmul.f32 %v611, %v629
    %v632 = vpack.c.bf16 %v631, %v630
    %v641 = vunpack.c.l.b16 %v81
    %v642 = vunpack.c.l.b16 %v82
    %v643 = vunpack.c.l.b16 %v83
    %v644 = vunpack.c.l.b16 %v84
    %v645 = vunpack.c.l.b16 %v85
    %v646 = vunpack.c.l.b16 %v86
    %v647 = vunpack.c.l.b16 %v87
    %v648 = vunpack.c.l.b16 %v88
    %v649 = vpack.c.b16 %v642, %v641
    %v650 = vpack.c.b16 %v644, %v643
    %v651 = vpack.c.b16 %v646, %v645
    %v652 = vpack.c.b16 %v648, %v647
    %vm657 = vcmask 523264
    %v659 = vsel %vm657, %v632, 0
    %661 = vmatprep.subr.bf16.mxu0 0
    %662 = vmatpush1.bf16.msra.mxu0 %v649
    %663 = vmatprep.subr.bf16.mxu0 0
    %664 = vmatpush1.bf16.msra.mxu0 %v650
    %665 = vmatprep.subr.bf16.mxu0 0
    %666 = vmatpush1.bf16.msra.mxu0 %v651
    %667 = vmatprep.subr.bf16.mxu0 0
    %668 = vmatpush1.bf16.msra.mxu0 %v652
    %669 = vmatprep.subr.bf16.mxu0 0
    %670 = vmatpush1.bf16.msra.mxu0 0
    %671 = vmatprep.subr.bf16.mxu0 0
    %672 = vmatpush1.bf16.msra.mxu0 0
    %673 = vmatprep.subr.bf16.mxu0 0
    %674 = vmatpush1.bf16.msra.mxu0 0
    %675 = vmatprep.subr.bf16.mxu0 0
    %676 = vmatpush1.bf16.msra.mxu0 0
    %677 = vmatprep.subr.bf16.mxu0 0
    %678 = vmatpush1.bf16.msra.mxu0 0
    %679 = vmatprep.subr.bf16.mxu0 0
    %680 = vmatpush1.bf16.msra.mxu0 0
    %681 = vmatprep.subr.bf16.mxu0 0
    %682 = vmatpush1.bf16.msra.mxu0 0
    %683 = vmatprep.subr.bf16.mxu0 0
    %684 = vmatpush1.bf16.msra.mxu0 0
    %685 = vmatprep.subr.bf16.mxu0 0
    %686 = vmatpush1.bf16.msra.mxu0 0
    %687 = vmatprep.subr.bf16.mxu0 0
    %688 = vmatpush1.bf16.msra.mxu0 0
    %689 = vmatprep.subr.bf16.mxu0 0
    %690 = vmatpush1.bf16.msra.mxu0 0
    %691 = vmatprep.subr.bf16.mxu0 0
    %692 = vmatpush1.bf16.msra.mxu0 0
    %693 = vmatprep.mubr.bf16.mxu0 0
    %694 = vmatmul.mubr.bf16.gmra.mrb[0].mxu0 %v659
    %v695 = vpop.f32.mrb[0].mxu0
    %v696 = vadd.f32 %v98, %v695
    %v697 = vpop.f32.mrb[0].mxu0
    %v698 = vpop.f32.mrb[0].mxu0
    %v699 = vadd.f32 %v98, %v698
    %v700 = vpop.f32.mrb[0].mxu0
    %701 = vdwg.mxu0
    %v702 = vadd.f32 %v555, %v696
    %v703 = vadd.f32 %v556, %v699
    %v704 = vsel %vm139, %v702, 0.0
    %705 = vadd.xlane.f32.xlu0 %v704
    %v706 = vpop.xlane.xlu0 %705
    %v707 = vsel %vm139, %v703, 0.0
    %708 = vadd.xlane.f32.xlu0 %v707
    %v709 = vpop.xlane.xlu0 %708
    %v710 = vmul.f32 %v706, %v532
    %v711 = vmul.f32 %v709, %v532
    %v712 = vsub.f32 %v702, %v710
    %v713 = vsub.f32 %v703, %v711
    %v714 = vmul.f32 %v712, %v712
    %v715 = vmul.f32 %v713, %v713
    %v716 = vsel %vm139, %v714, 0.0
    %717 = vadd.xlane.f32.xlu0 %v716
    %v718 = vpop.xlane.xlu0 %717
    %v719 = vsel %vm139, %v715, 0.0
    %720 = vadd.xlane.f32.xlu0 %v719
    %v721 = vpop.xlane.xlu0 %720
    %v722 = vmul.f32 %v718, %v532
    %v723 = vmul.f32 %v721, %v532
    %v724 = vadd.f32 %v722, 1e-05
    %v725 = vadd.f32 %v723, 1e-05
    %v726 = vrsqrt.pop %v724
    %v727 = vrsqrt.pop %v725
    %v728 = vmul.f32 %v712, %v726
    %v729 = vmul.f32 %v713, %v727
    %v730 = vmul.f32 %v728, %v99
    %v731 = vmul.f32 %v729, %v99
    %v732 = vadd.f32 %v730, %v100
    %v733 = vadd.f32 %v731, %v100
    %v734 = vld [vmem:[%s2] sm:$0xff]
    %v735 = vpack.c.bf16 %v734, %v734
    %v736 = vpack.c.bf16 %v733, %v732
    %v738 = vsel %vm365, %v735, 0
    %740 = vmatprep.subr.bf16.mxu0 0
    %741 = vmatpush1.bf16.msra.mxu0 %v736
    %742 = vmatprep.subr.bf16.mxu0 0
    %743 = vmatpush1.bf16.msra.mxu0 0
    %744 = vmatprep.subr.bf16.mxu0 0
    %745 = vmatpush1.bf16.msra.mxu0 0
    %746 = vmatprep.subr.bf16.mxu0 0
    %747 = vmatpush1.bf16.msra.mxu0 0
    %748 = vmatprep.subr.bf16.mxu0 0
    %749 = vmatpush1.bf16.msra.mxu0 0
    %750 = vmatprep.subr.bf16.mxu0 0
    %751 = vmatpush1.bf16.msra.mxu0 0
    %752 = vmatprep.subr.bf16.mxu0 0
    %753 = vmatpush1.bf16.msra.mxu0 0
    %754 = vmatprep.subr.bf16.mxu0 0
    %755 = vmatpush1.bf16.msra.mxu0 0
    %756 = vmatprep.subr.bf16.mxu0 0
    %757 = vmatpush1.bf16.msra.mxu0 0
    %758 = vmatprep.subr.bf16.mxu0 0
    %759 = vmatpush1.bf16.msra.mxu0 0
    %760 = vmatprep.subr.bf16.mxu0 0
    %761 = vmatpush1.bf16.msra.mxu0 0
    %762 = vmatprep.subr.bf16.mxu0 0
    %763 = vmatpush1.bf16.msra.mxu0 0
    %764 = vmatprep.subr.bf16.mxu0 0
    %765 = vmatpush1.bf16.msra.mxu0 0
    %766 = vmatprep.subr.bf16.mxu0 0
    %767 = vmatpush1.bf16.msra.mxu0 0
    %768 = vmatprep.subr.bf16.mxu0 0
    %769 = vmatpush1.bf16.msra.mxu0 0
    %770 = vmatprep.subr.bf16.mxu0 0
    %771 = vmatpush1.bf16.msra.mxu0 0
    %772 = vmatprep.mubr.bf16.mxu0 0
    %773 = vmatmul.mubr.bf16.gmra.mrb[0].mxu0 %v738
    %v774 = vpop.f32.mrb[0].mxu0
    %v775 = vadd.f32 0.0, %v774
    %v776 = vpop.f32.mrb[0].mxu0
    %v777 = vpop.f32.mrb[0].mxu0
    %v778 = vpop.f32.mrb[0].mxu0
    %779 = vdwg.mxu0
    %v780 = vpack.c.bf16 %v775, %v775
    %v785 = vunpack.c.l.b16 %v89
    %v786 = vunpack.c.l.b16 %v90
    %v787 = vunpack.c.l.b16 %v91
    %v788 = vunpack.c.l.b16 %v92
    %v789 = vpack.c.b16 %v786, %v785
    %v790 = vpack.c.b16 %v788, %v787
    %v794 = vsel %vm139, %v780, 0
    %796 = vmatprep.subr.bf16.mxu0 0
    %797 = vmatpush1.bf16.msra.mxu0 %v789
    %798 = vmatprep.subr.bf16.mxu0 0
    %799 = vmatpush1.bf16.msra.mxu0 %v790
    %800 = vmatprep.subr.bf16.mxu0 0
    %801 = vmatpush1.bf16.msra.mxu0 0
    %802 = vmatprep.subr.bf16.mxu0 0
    %803 = vmatpush1.bf16.msra.mxu0 0
    %804 = vmatprep.subr.bf16.mxu0 0
    %805 = vmatpush1.bf16.msra.mxu0 0
    %806 = vmatprep.subr.bf16.mxu0 0
    %807 = vmatpush1.bf16.msra.mxu0 0
    %808 = vmatprep.subr.bf16.mxu0 0
    %809 = vmatpush1.bf16.msra.mxu0 0
    %810 = vmatprep.subr.bf16.mxu0 0
    %811 = vmatpush1.bf16.msra.mxu0 0
    %812 = vmatprep.subr.bf16.mxu0 0
    %813 = vmatpush1.bf16.msra.mxu0 0
    %814 = vmatprep.subr.bf16.mxu0 0
    %815 = vmatpush1.bf16.msra.mxu0 0
    %816 = vmatprep.subr.bf16.mxu0 0
    %817 = vmatpush1.bf16.msra.mxu0 0
    %818 = vmatprep.subr.bf16.mxu0 0
    %819 = vmatpush1.bf16.msra.mxu0 0
    %820 = vmatprep.subr.bf16.mxu0 0
    %821 = vmatpush1.bf16.msra.mxu0 0
    %822 = vmatprep.subr.bf16.mxu0 0
    %823 = vmatpush1.bf16.msra.mxu0 0
    %824 = vmatprep.subr.bf16.mxu0 0
    %825 = vmatpush1.bf16.msra.mxu0 0
    %826 = vmatprep.subr.bf16.mxu0 0
    %827 = vmatpush1.bf16.msra.mxu0 0
    %828 = vmatprep.mubr.bf16.mxu0 0
    %829 = vmatmul.mubr.bf16.gmra.mrb[0].mxu0 %v794
    %v830 = vpop.f32.mrb[0].mxu0
    %v831 = vadd.f32 %v101, %v830
    %v832 = vpop.f32.mrb[0].mxu0
    %v833 = vpop.f32.mrb[0].mxu0
    %v834 = vpop.f32.mrb[0].mxu0
    %835 = vdwg.mxu0
    %836 = vmax.xlane.f32.xlu0 %v831
    %v837 = vpop.xlane.xlu0 %836
    %v838 = vsub.f32 %v831, %v837
    %v839 = vmul.f32 %v838, 1.442695
    %v840 = vpow.pop %v839
    %841 = vadd.xlane.f32.xlu0 %v840
    %v842 = vpop.xlane.xlu0 %841
    %v843 = vrcp.pop %v842
    %v844 = vmul.f32 %v840, %v843
    %845 = vst [vmem:[%s5] sm:$0xff] %v844
    // Predicated region
    $region30: #{_run_kernel.1} parent=1 // pred_check
      _
    $region31: #{_run_kernel.1} parent=1 // pred_check_branch
      %847 = sbr.rel (0) target = $region33
    $region32: #{_run_kernel.1} parent=1 // pred_region
      _
    $region33: #{_run_kernel.1} parent=1 // pred_fallthru
      _
    // Predicated region
    $region34: #{_run_kernel.1} parent=1 // pred_check
      _
    $region35: #{_run_kernel.1} parent=1 // pred_check_branch
      %849 = sbr.rel (0) target = $region37
    $region36: #{_run_kernel.1} parent=1 // pred_region
      _
    $region37: #{_run_kernel.1} parent=1 // pred_fallthru
      _
    %850 = vsyncpa [#allocation3], 1
    %851 = vsyncpa [#allocation5], 1

</llo_original>
